<compile_context>
chip_gen: v5e
topology: v5e:2x2
jax: 0.10.0
libtpu: 0.0.40
codegen_flags: <defaults>
</compile_context>

<pallas_src>
import jax
import jax.numpy as jnp
from jax.experimental import pallas as pl
from jax.experimental.pallas import tpu as pltpu


def critic_kernel(x_ref, w1_ref, b1_ref, w2_ref, b2_ref,
                  w3_ref, b3_ref, w4_ref, b4_ref, o_ref):
    # ---- Layer 1: [TB, in] @ [in, 128], full f32 (K is tiny) ----
    h = jnp.dot(x_ref[...], w1_ref[...],
                preferred_element_type=jnp.float32) + b1_ref[...]
    h = jnp.maximum(h, 0.0)

    # ---- Layer 2: [TB, 128] @ [128, 128], bf16 operands, f32 accumulate ----
    h = jnp.dot(h.astype(jnp.bfloat16), w2_ref[...],
                preferred_element_type=jnp.float32) + b2_ref[...]
    h = jnp.maximum(h, 0.0)

    # ---- Layer 3: [TB, 128] @ [128, 128] ----
    h = jnp.dot(h.astype(jnp.bfloat16), w3_ref[...],
                preferred_element_type=jnp.float32) + b3_ref[...]
    h = jnp.maximum(h, 0.0)

    # ---- Layer 4 (out_features == 1): VPU multiply + XLU lane reduce ----
    # w4_ref is a (1, 128) f32 row; avoids an N=1 MXU matmul entirely.
    # b4 is an SMEM scalar.
    v = jnp.sum(h * w4_ref[...], axis=-1, keepdims=True) + b4_ref[0, 0]

    # Direct (TB, 1) store; no lane-dense broadcast, no wrapper slice.
    o_ref[...] = v.astype(o_ref.dtype)


def _pick_batch_tile(B, block_b):
    """Batch tile: large (amortize ~0.35us/step), multiple of 8 or == B,
    and when the batch is big enough keep >=2 grid steps so a v7x chip can
    shard the batch axis over both TensorCores."""
    if B > block_b:
        return block_b                      # block_b is a multiple of 8
    if B >= 16 and B % 2 == 0 and (B // 2) % 8 == 0:
        return B // 2                       # 2 grid steps -> 2 TCs on v7x
    return B                                # full-array block (always legal)


def critic_forward(x, params, *, block_b=2048):
    """x: [B, input_dim] float32.  Returns [B, 1] float32."""
    (w1, b1, w2, b2, w3, b3, w4, b4) = params
    B, in_dim = x.shape
    H = w1.shape[1]                         # hidden_dim (=128, lane width)

    # One-time casts outside the kernel.
    w1f = w1.astype(jnp.float32)            # layer 1 stays f32 (K = in_dim)
    w2b = w2.astype(jnp.bfloat16)
    w3b = w3.astype(jnp.bfloat16)
    w4_row = w4.reshape(1, H).astype(jnp.float32)
    b4_s = b4.reshape(1, 1).astype(jnp.float32)   # SMEM scalar

    tb = _pick_batch_tile(B, block_b)
    nb = pl.cdiv(B, tb)

    # Weights / biases: full block, constant index_map -> VMEM-resident.
    resident = lambda a: pl.BlockSpec(a.shape, lambda i: (0,) * a.ndim)

    # Advisory cost so XLA schedules surrounding ops around this call.
    flops = B * (2 * in_dim * H + 2 * 2 * H * H + 2 * H)
    weight_bytes = (w1f.size * 4 + w2b.size * 2 + w3b.size * 2 + w4_row.size * 4
                    + b1.size * 4 + b2.size * 4 + b3.size * 4 + 4)
    bytes_accessed = B * (4 * in_dim + 4) + weight_bytes

    out = pl.pallas_call(
        critic_kernel,
        out_shape=jax.ShapeDtypeStruct((B, 1), jnp.float32),
        grid=(nb,),
        in_specs=[
            pl.BlockSpec((tb, in_dim), lambda i: (i, 0)),   # x, tiled on batch
            resident(w1f), resident(b1),
            resident(w2b), resident(b2),
            resident(w3b), resident(b3),
            resident(w4_row),
            pl.BlockSpec(memory_space=pltpu.MemorySpace.SMEM),   # b4 scalar
        ],
        out_specs=pl.BlockSpec((tb, 1), lambda i: (i, 0)),
        compiler_params=pltpu.CompilerParams(
            dimension_semantics=("parallel",)),
        cost_estimate=pl.CostEstimate(flops=flops, transcendentals=0,
                                      bytes_accessed=bytes_accessed),
    )(x, w1f, b1, w2b, b2, w3b, b3, w4_row, b4_s)

    return out


def init_params(key, input_dim, hidden_dim=128):
    """Deterministic PyTorch-style init: U(-1/sqrt(fan_in), 1/sqrt(fan_in)).
    Weights stored as [in_features, out_features]."""
    dims = [(input_dim, hidden_dim), (hidden_dim, hidden_dim),
            (hidden_dim, hidden_dim), (hidden_dim, 1)]
    params = []
    for (fan_in, fan_out) in dims:
        key, kw, kb = jax.random.split(key, 3)
        bound = 1.0 / jnp.sqrt(fan_in)
        w = jax.random.uniform(kw, (fan_in, fan_out), jnp.float32, -bound, bound)
        b = jax.random.uniform(kb, (1, fan_out), jnp.float32, -bound, bound)
        params += [w, b]
    return tuple(params)


def critic_reference_f32(x, params):
    (w1, b1, w2, b2, w3, b3, w4, b4) = params
    h = jnp.maximum(x @ w1 + b1, 0.0)
    h = jnp.maximum(h @ w2 + b2, 0.0)
    h = jnp.maximum(h @ w3 + b3, 0.0)
    return h @ w4 + b4


def critic_reference_mixed(x, params):
    """Reference mirroring the kernel's precision: f32 layer 1, bf16-operand /
    f32-accumulate layers 2-3, f32 VPU final layer."""
    (w1, b1, w2, b2, w3, b3, w4, b4) = params
    bf = jnp.bfloat16
    h = jnp.maximum(jnp.dot(x, w1, preferred_element_type=jnp.float32) + b1, 0.0)
    h = jnp.maximum(jnp.dot(h.astype(bf), w2.astype(bf),
                            preferred_element_type=jnp.float32) + b2, 0.0)
    h = jnp.maximum(jnp.dot(h.astype(bf), w3.astype(bf),
                            preferred_element_type=jnp.float32) + b3, 0.0)
    return jnp.sum(h * w4.reshape(1, -1), axis=-1, keepdims=True) + b4


if __name__ == "__main__":
    key = jax.random.PRNGKey(0)
    kx, kp = jax.random.split(key)

    batch = 4
    input_dim = 8        # LunarLander-v2 observation dimension
    hidden_dim = 128

    x = jax.random.normal(kx, (batch, input_dim), jnp.float32)
    params = init_params(kp, input_dim, hidden_dim)

    out = jax.block_until_ready(critic_forward(x, params))
    assert out.shape == (batch, 1), out.shape

    # Tight check vs. a reference using the same mixed precision.
    ref_mixed = critic_reference_mixed(x, params)
    assert jnp.allclose(out, ref_mixed, atol=1e-2, rtol=1e-2), (out, ref_mixed)

    # Loose check vs. the full-f32 reference (bf16 hidden layers 2-3).
    ref_f32 = critic_reference_f32(x, params)
    assert jnp.allclose(out, ref_f32, atol=5e-2, rtol=5e-2), (out, ref_f32)

    # Exercise the multi-step (tiled) grid path as well.
    batch2 = 32
    x2 = jax.random.normal(kx, (batch2, input_dim), jnp.float32)
    out2 = jax.block_until_ready(critic_forward(x2, params))
    assert out2.shape == (batch2, 1), out2.shape
    ref2 = critic_reference_mixed(x2, params)
    assert jnp.allclose(out2, ref2, atol=1e-2, rtol=1e-2), (out2, ref2)

    print("KERNEL_OK")
</pallas_src>

<mosaic_0001>
module attributes {stable_mosaic.version = 11 : i64} {
  func.func @critic_kernel(%arg0: i32, %arg1: memref<4x8xf32, #tpu.memory_space<vmem>>, %arg2: memref<8x128xf32, #tpu.memory_space<vmem>>, %arg3: memref<1x128xf32, #tpu.memory_space<vmem>>, %arg4: memref<128x128xbf16, #tpu.memory_space<vmem>>, %arg5: memref<1x128xf32, #tpu.memory_space<vmem>>, %arg6: memref<128x128xbf16, #tpu.memory_space<vmem>>, %arg7: memref<1x128xf32, #tpu.memory_space<vmem>>, %arg8: memref<1x128xf32, #tpu.memory_space<vmem>>, %arg9: memref<1x1xf32, #tpu.memory_space<smem>>, %arg10: memref<4x1xf32, #tpu.memory_space<vmem>>) attributes {dimension_semantics = [#tpu.dimension_semantics<parallel>], iteration_bounds = array<i64: 1>, scalar_prefetch = 0 : i64, scratch_operands = 0 : i64, tpu.core_type = #tpu.core_type<tc>, window_params = [{transform_indices = @transform_0, window_bounds = array<i64: 4, 8>}, {pipeline_mode = #tpu.pipeline_mode<synchronous>, transform_indices = @transform_1, window_bounds = array<i64: 8, 128>}, {pipeline_mode = #tpu.pipeline_mode<synchronous>, transform_indices = @transform_2, window_bounds = array<i64: 1, 128>}, {pipeline_mode = #tpu.pipeline_mode<synchronous>, transform_indices = @transform_3, window_bounds = array<i64: 128, 128>}, {pipeline_mode = #tpu.pipeline_mode<synchronous>, transform_indices = @transform_4, window_bounds = array<i64: 1, 128>}, {pipeline_mode = #tpu.pipeline_mode<synchronous>, transform_indices = @transform_5, window_bounds = array<i64: 128, 128>}, {pipeline_mode = #tpu.pipeline_mode<synchronous>, transform_indices = @transform_6, window_bounds = array<i64: 1, 128>}, {pipeline_mode = #tpu.pipeline_mode<synchronous>, transform_indices = @transform_7, window_bounds = array<i64: 1, 128>}, {transform_indices = @transform_8, window_bounds = array<i64: 1, 1>}, {transform_indices = @transform_9, window_bounds = array<i64: 4, 1>}]} {
    %c0 = arith.constant 0 : index
    %c0_0 = arith.constant 0 : index
    %0 = vector.load %arg1[%c0, %c0_0] : memref<4x8xf32, #tpu.memory_space<vmem>>, vector<4x8xf32>
    %c0_1 = arith.constant 0 : index
    %c0_2 = arith.constant 0 : index
    %1 = vector.load %arg2[%c0_1, %c0_2] : memref<8x128xf32, #tpu.memory_space<vmem>>, vector<8x128xf32>
    %cst = arith.constant dense<0.000000e+00> : vector<4x128xf32>
    %2 = tpu.matmul %0, %1, %cst {dimension_numbers = #tpu.dot_dimension_numbers<[1], [0], [0], [1], [0, 0, 1, 1], [], []>} : vector<4x8xf32>, vector<8x128xf32>, vector<4x128xf32> -> vector<4x128xf32>
    %c0_3 = arith.constant 0 : index
    %c0_4 = arith.constant 0 : index
    %3 = vector.load %arg3[%c0_3, %c0_4] : memref<1x128xf32, #tpu.memory_space<vmem>>, vector<1x128xf32>
    %4 = vector.broadcast %3 : vector<1x128xf32> to vector<4x128xf32>
    %5 = arith.addf %2, %4 : vector<4x128xf32>
    %cst_5 = arith.constant 0.000000e+00 : f32
    %6 = vector.broadcast %cst_5 : f32 to vector<4x128xf32>
    %7 = arith.maximumf %5, %6 : vector<4x128xf32>
    %8 = arith.truncf %7 : vector<4x128xf32> to vector<4x128xbf16>
    %c0_6 = arith.constant 0 : index
    %c0_7 = arith.constant 0 : index
    %9 = vector.load %arg4[%c0_6, %c0_7] : memref<128x128xbf16, #tpu.memory_space<vmem>>, vector<128x128xbf16>
    %cst_8 = arith.constant dense<0.000000e+00> : vector<4x128xf32>
    %10 = tpu.matmul %8, %9, %cst_8 {dimension_numbers = #tpu.dot_dimension_numbers<[1], [0], [0], [1], [0, 0, 1, 1], [], []>} : vector<4x128xbf16>, vector<128x128xbf16>, vector<4x128xf32> -> vector<4x128xf32>
    %c0_9 = arith.constant 0 : index
    %c0_10 = arith.constant 0 : index
    %11 = vector.load %arg5[%c0_9, %c0_10] : memref<1x128xf32, #tpu.memory_space<vmem>>, vector<1x128xf32>
    %12 = vector.broadcast %11 : vector<1x128xf32> to vector<4x128xf32>
    %13 = arith.addf %10, %12 : vector<4x128xf32>
    %cst_11 = arith.constant 0.000000e+00 : f32
    %14 = vector.broadcast %cst_11 : f32 to vector<4x128xf32>
    %15 = arith.maximumf %13, %14 : vector<4x128xf32>
    %16 = arith.truncf %15 : vector<4x128xf32> to vector<4x128xbf16>
    %c0_12 = arith.constant 0 : index
    %c0_13 = arith.constant 0 : index
    %17 = vector.load %arg6[%c0_12, %c0_13] : memref<128x128xbf16, #tpu.memory_space<vmem>>, vector<128x128xbf16>
    %cst_14 = arith.constant dense<0.000000e+00> : vector<4x128xf32>
    %18 = tpu.matmul %16, %17, %cst_14 {dimension_numbers = #tpu.dot_dimension_numbers<[1], [0], [0], [1], [0, 0, 1, 1], [], []>} : vector<4x128xbf16>, vector<128x128xbf16>, vector<4x128xf32> -> vector<4x128xf32>
    %c0_15 = arith.constant 0 : index
    %c0_16 = arith.constant 0 : index
    %19 = vector.load %arg7[%c0_15, %c0_16] : memref<1x128xf32, #tpu.memory_space<vmem>>, vector<1x128xf32>
    %20 = vector.broadcast %19 : vector<1x128xf32> to vector<4x128xf32>
    %21 = arith.addf %18, %20 : vector<4x128xf32>
    %cst_17 = arith.constant 0.000000e+00 : f32
    %22 = vector.broadcast %cst_17 : f32 to vector<4x128xf32>
    %23 = arith.maximumf %21, %22 : vector<4x128xf32>
    %c0_18 = arith.constant 0 : index
    %c0_19 = arith.constant 0 : index
    %24 = vector.load %arg8[%c0_18, %c0_19] : memref<1x128xf32, #tpu.memory_space<vmem>>, vector<1x128xf32>
    %25 = vector.broadcast %24 : vector<1x128xf32> to vector<4x128xf32>
    %26 = arith.mulf %23, %25 : vector<4x128xf32>
    %cst_20 = arith.constant dense<0.000000e+00> : vector<4xf32>
    %27 = vector.multi_reduction <add>, %26, %cst_20 [1] : vector<4x128xf32> to vector<4xf32>
    %28 = vector.shape_cast %27 : vector<4xf32> to vector<4x1xf32>
    %c0_21 = arith.constant 0 : index
    %c0_22 = arith.constant 0 : index
    %29 = memref.load %arg9[%c0_21, %c0_22] : memref<1x1xf32, #tpu.memory_space<smem>>
    %30 = vector.broadcast %29 : f32 to vector<4x1xf32>
    %31 = arith.addf %28, %30 : vector<4x1xf32>
    %c0_23 = arith.constant 0 : index
    %c0_24 = arith.constant 0 : index
    %32 = vector.load %arg10[%c0_23, %c0_24] : memref<4x1xf32, #tpu.memory_space<vmem>>, vector<4x1xf32>
    tpu.vector_store %arg10[%c0_23, %c0_24], %31 {strides = array<i32>} : memref<4x1xf32, #tpu.memory_space<vmem>>, vector<4x1xf32>,
    return
  }
  func.func @transform_0(%arg0: i32) -> (i32, i32) {
    %c0_i32 = arith.constant 0 : i32
    %c0_i32_0 = arith.constant 0 : i32
    return %arg0, %c0_i32 : i32, i32
  }
  func.func @transform_1(%arg0: i32) -> (i32, i32) {
    %c0_i32 = arith.constant 0 : i32
    %c0_i32_0 = arith.constant 0 : i32
    %c0_i32_1 = arith.constant 0 : i32
    return %c0_i32, %c0_i32_0 : i32, i32
  }
  func.func @transform_2(%arg0: i32) -> (i32, i32) {
    %c0_i32 = arith.constant 0 : i32
    %c0_i32_0 = arith.constant 0 : i32
    %c0_i32_1 = arith.constant 0 : i32
    return %c0_i32, %c0_i32_0 : i32, i32
  }
  func.func @transform_3(%arg0: i32) -> (i32, i32) {
    %c0_i32 = arith.constant 0 : i32
    %c0_i32_0 = arith.constant 0 : i32
    %c0_i32_1 = arith.constant 0 : i32
    return %c0_i32, %c0_i32_0 : i32, i32
  }
  func.func @transform_4(%arg0: i32) -> (i32, i32) {
    %c0_i32 = arith.constant 0 : i32
    %c0_i32_0 = arith.constant 0 : i32
    %c0_i32_1 = arith.constant 0 : i32
    return %c0_i32, %c0_i32_0 : i32, i32
  }
  func.func @transform_5(%arg0: i32) -> (i32, i32) {
    %c0_i32 = arith.constant 0 : i32
    %c0_i32_0 = arith.constant 0 : i32
    %c0_i32_1 = arith.constant 0 : i32
    return %c0_i32, %c0_i32_0 : i32, i32
  }
  func.func @transform_6(%arg0: i32) -> (i32, i32) {
    %c0_i32 = arith.constant 0 : i32
    %c0_i32_0 = arith.constant 0 : i32
    %c0_i32_1 = arith.constant 0 : i32
    return %c0_i32, %c0_i32_0 : i32, i32
  }
  func.func @transform_7(%arg0: i32) -> (i32, i32) {
    %c0_i32 = arith.constant 0 : i32
    %c0_i32_0 = arith.constant 0 : i32
    %c0_i32_1 = arith.constant 0 : i32
    return %c0_i32, %c0_i32_0 : i32, i32
  }
  func.func @transform_8(%arg0: i32) -> (i32, i32) {
    %c0_i32 = arith.constant 0 : i32
    %c0_i32_0 = arith.constant 0 : i32
    %c0_i32_1 = arith.constant 0 : i32
    return %c0_i32, %c0_i32_0 : i32, i32
  }
  func.func @transform_9(%arg0: i32) -> (i32, i32) {
    %c0_i32 = arith.constant 0 : i32
    %c0_i32_0 = arith.constant 0 : i32
    return %arg0, %c0_i32 : i32, i32
  }
}

</mosaic_0001>

<llo_original>
// kernel: tpu_custom_call.1
$region0: #{tpu_custom_call.1}
  #allocation0 [shape = 'u32[]', space=smem, size = 0x4, offset = 0x4, fixed_abs, tag = 'smem constant byte address 0x4 - core index']
  #allocation1 [shape = 'u32[72,128]{1,0:T(1,128)}', space=vmem, size = 0x9000, scoped, tag = 'internal scratch']
  #allocation2 [shape = 'f32[1,1]{1,0:T(1,128)S(6)}', space=smem, size = 0x200, scoped, tag = 'scoped memory for tpu_custom_call.1']
  %s0 = inlined_call_operand.hbm [shape: f32[4,8], index: 0, kind: input, shape index: {}]
  %s1 = inlined_call_operand.hbm [shape: f32[8,128], index: 1, kind: input, shape index: {}]
  %s2 = inlined_call_operand.vmem [shape: f32[1,128], index: 2, kind: input, shape index: {}]
  %s3 = inlined_call_operand.hbm [shape: bf16[128,128], index: 3, kind: input, shape index: {}]
  %s4 = inlined_call_operand.vmem [shape: f32[1,128], index: 4, kind: input, shape index: {}]
  %s5 = inlined_call_operand.hbm [shape: bf16[128,128], index: 5, kind: input, shape index: {}]
  %s6 = inlined_call_operand.vmem [shape: f32[1,128], index: 6, kind: input, shape index: {}]
  %s7 = inlined_call_operand.vmem [shape: f32[1,128], index: 7, kind: input, shape index: {}]
  %s8 = inlined_call_operand.<no memory space> [shape: f32[1,1], index: 8, kind: input, shape index: {}]
  %s9 = inlined_call_operand.vmem [shape: f32[4,1], index: 9, kind: output, shape index: {}]
  %s10 = sld [smem:[#allocation0]]
  $region62: #{tpu_custom_call.1} parent=0
    _
  %s12 = ssub.s32 1, %s10
  %s13 = scalar_select 0, %s12, %s10
  %14 = sst [smem:[#allocation2]] %s8
  $region1: #{tpu_custom_call.1} parent=0
    #allocation3 [shape = 'u8[2048]{0}', space=vmem, size = 0x800, scoped, tag = 'input window, operand 0, single buffered']
    #allocation4 [shape = 's32[1]{0}', space=sflag, size = 0x4, scoped, tag = 'scoped memory for tpu_custom_call.1']
    #allocation5 [shape = 'u8[4096]{0}', space=vmem, size = 0x1000, scoped, tag = 'input window, operand 1, single buffered']
    #allocation6 [shape = 's32[1]{0}', space=sflag, size = 0x4, scoped, tag = 'scoped memory for tpu_custom_call.1']
    #allocation7 [shape = 'u8[32768]{0}', space=vmem, size = 0x8000, scoped, tag = 'input window, operand 3, single buffered']
    #allocation8 [shape = 'u8[32768]{0}', space=vmem, size = 0x8000, scoped, tag = 'input window, operand 5, single buffered']
    #allocation9 [shape = 's32[1]{0}', space=sflag, size = 0x4, scoped, tag = 'scoped memory for tpu_custom_call.1']
    %15 = vsyncpa [#allocation4], 0
    %16 = vsyncpa [#allocation6], 0
    %17 = vsyncpa [#allocation9], 0
    // Predicated region
    $region2: #{tpu_custom_call.1} parent=1 // pred_check
      _
    $region3: #{tpu_custom_call.1} parent=1 // pred_check_branch
      %19 = sbr.rel (0) target = $region5
    $region4: #{tpu_custom_call.1} parent=1 // pred_region
      %21 = vsyncadd [#allocation4], 0
      %s23 = sshll.u32 %s0, 4
      %s24 = int_to_ptr.hbm [resolvable:$true] %s23
      %s25 = sshll.u32 [#allocation3], 4
      %s26 = int_to_ptr.vmem [resolvable:$true] %s25
      %28 = dma.hbm_to_vmem [thread:$0]  %s24, 64, %s26, [#allocation4]
    $region5: #{tpu_custom_call.1} parent=1 // pred_fallthru
      _
    // Predicated region
    $region6: #{tpu_custom_call.1} parent=1 // pred_check
      _
    $region7: #{tpu_custom_call.1} parent=1 // pred_check_branch
      %30 = sbr.rel (0) target = $region9
    $region8: #{tpu_custom_call.1} parent=1 // pred_region
      %32 = vsyncadd [#allocation6], 0
      %s34 = sshll.u32 %s1, 4
      %s35 = int_to_ptr.hbm [resolvable:$true] %s34
      %s36 = sshll.u32 [#allocation5], 4
      %s37 = int_to_ptr.vmem [resolvable:$true] %s36
      %39 = dma.hbm_to_vmem [thread:$0]  %s35, 128, %s37, [#allocation6]
    $region9: #{tpu_custom_call.1} parent=1 // pred_fallthru
      _
    // Predicated region
    $region10: #{tpu_custom_call.1} parent=1 // pred_check
      _
    $region11: #{tpu_custom_call.1} parent=1 // pred_check_branch
      %41 = sbr.rel (0) target = $region13
    $region12: #{tpu_custom_call.1} parent=1 // pred_region
      _
    $region13: #{tpu_custom_call.1} parent=1 // pred_fallthru
      _
    // Predicated region
    $region14: #{tpu_custom_call.1} parent=1 // pred_check
      _
    $region15: #{tpu_custom_call.1} parent=1 // pred_check_branch
      %43 = sbr.rel (0) target = $region17
    $region16: #{tpu_custom_call.1} parent=1 // pred_region
      %45 = vsyncadd [#allocation6], 0
      %s46 = sshll.u32 %s3, 4
      %s47 = int_to_ptr.hbm [resolvable:$true] %s46
      %s48 = sshll.u32 [#allocation7], 4
      %s49 = int_to_ptr.vmem [resolvable:$true] %s48
      %54 = dma.hbm_to_vmem [thread:$0]  %s47, 1024, %s49, [#allocation6], 64, 64, 4
    $region17: #{tpu_custom_call.1} parent=1 // pred_fallthru
      _
    // Predicated region
    $region18: #{tpu_custom_call.1} parent=1 // pred_check
      _
    $region19: #{tpu_custom_call.1} parent=1 // pred_check_branch
      %56 = sbr.rel (0) target = $region21
    $region20: #{tpu_custom_call.1} parent=1 // pred_region
      _
    $region21: #{tpu_custom_call.1} parent=1 // pred_fallthru
      _
    // Predicated region
    $region22: #{tpu_custom_call.1} parent=1 // pred_check
      _
    $region23: #{tpu_custom_call.1} parent=1 // pred_check_branch
      %58 = sbr.rel (0) target = $region25
    $region24: #{tpu_custom_call.1} parent=1 // pred_region
      %60 = vsyncadd [#allocation9], 0
      %s61 = sshll.u32 %s5, 4
      %s62 = int_to_ptr.hbm [resolvable:$true] %s61
      %s63 = sshll.u32 [#allocation8], 4
      %s64 = int_to_ptr.vmem [resolvable:$true] %s63
      %69 = dma.hbm_to_vmem [thread:$0]  %s62, 1024, %s64, [#allocation9], 64, 64, 4
    $region25: #{tpu_custom_call.1} parent=1 // pred_fallthru
      _
    // Predicated region
    $region26: #{tpu_custom_call.1} parent=1 // pred_check
      _
    $region27: #{tpu_custom_call.1} parent=1 // pred_check_branch
      %71 = sbr.rel (0) target = $region29
    $region28: #{tpu_custom_call.1} parent=1 // pred_region
      _
    $region29: #{tpu_custom_call.1} parent=1 // pred_fallthru
      _
    // Predicated region
    $region30: #{tpu_custom_call.1} parent=1 // pred_check
      _
    $region31: #{tpu_custom_call.1} parent=1 // pred_check_branch
      %73 = sbr.rel (0) target = $region33
    $region32: #{tpu_custom_call.1} parent=1 // pred_region
      _
    $region33: #{tpu_custom_call.1} parent=1 // pred_fallthru
      _
    // Predicated region
    $region34: #{tpu_custom_call.1} parent=1 // pred_check
      _
    $region35: #{tpu_custom_call.1} parent=1 // pred_check_branch
      %75 = sbr.rel (0) target = $region37
    $region36: #{tpu_custom_call.1} parent=1 // pred_region
      _
    $region37: #{tpu_custom_call.1} parent=1 // pred_fallthru
      _
    // Predicated region
    $region38: #{tpu_custom_call.1} parent=1 // pred_check
      _
    $region39: #{tpu_custom_call.1} parent=1 // pred_check_branch
      %77 = sbr.rel (0) target = $region41
    $region40: #{tpu_custom_call.1} parent=1 // pred_region
      %79 = dma.done [#allocation4], 64
    $region41: #{tpu_custom_call.1} parent=1 // pred_fallthru
      _
    // Predicated region
    $region42: #{tpu_custom_call.1} parent=1 // pred_check
      _
    $region43: #{tpu_custom_call.1} parent=1 // pred_check_branch
      %81 = sbr.rel (0) target = $region45
    $region44: #{tpu_custom_call.1} parent=1 // pred_region
      %83 = dma.done [#allocation6], 128
    $region45: #{tpu_custom_call.1} parent=1 // pred_fallthru
      _
    // Predicated region
    $region46: #{tpu_custom_call.1} parent=1 // pred_check
      _
    $region47: #{tpu_custom_call.1} parent=1 // pred_check_branch
      %85 = sbr.rel (0) target = $region49
    $region48: #{tpu_custom_call.1} parent=1 // pred_region
      %87 = dma.done [#allocation6], 1024
    $region49: #{tpu_custom_call.1} parent=1 // pred_fallthru
      _
    // Predicated region
    $region50: #{tpu_custom_call.1} parent=1 // pred_check
      _
    $region51: #{tpu_custom_call.1} parent=1 // pred_check_branch
      %89 = sbr.rel (0) target = $region53
    $region52: #{tpu_custom_call.1} parent=1 // pred_region
      %91 = dma.done [#allocation9], 1024
    $region53: #{tpu_custom_call.1} parent=1 // pred_fallthru
      _
    %v92 = vld [vmem:[#allocation3] sm:$0xf]
    %v93 = vld [vmem:[#allocation5] sm:$0xff]
    %v94 = vld [vmem:[%s2] sm:$0x1]
    %v96 = vperm.slane %v94, 0
    %vm98 = vcmask 64512
    %v100 = vsel %vm98, %v92, 0
    %102 = vmatpush.msra.mxu0 0.0
    %103 = vmatpush.msra.mxu0 0.0
    %104 = vmatpush.msra.mxu0 0.0
    %105 = vmatpush.msra.mxu0 0.0
    %106 = vmatpush.msra.mxu0 0.0
    %107 = vmatpush.msra.mxu0 0.0
    %108 = vmatpush.msra.mxu0 0.0
    %109 = vmatpush.msra.mxu0 0.0
    %110 = vmatpush.msra.mxu0 0.0
    %111 = vmatpush.msra.mxu0 0.0
    %112 = vmatpush.msra.mxu0 0.0
    %113 = vmatpush.msra.mxu0 0.0
    %114 = vmatpush.msra.mxu0 0.0
    %115 = vmatpush.msra.mxu0 0.0
    %116 = vmatpush.msra.mxu0 0.0
    %117 = vmatpush.msra.mxu0 %v93
    %118 = vmatmul.f32.gmra.mxu0 %v100
    %v119 = vpop.f32.mrf.mxu0
    %v120 = vadd.f32 %v96, %v119
    %121 = vdwg.mxu0
    %v122 = vmax.f32 %v120, 0.0
    %v123 = vpack.c.bf16 %v122, %v122
    %v124 = vld [vmem:[#allocation7] sm:$0xf]
    %v125 = vld [vmem:[#allocation7 + $0x4] sm:$0xf]
    %v126 = vld [vmem:[#allocation7 + $0x8] sm:$0xf]
    %v127 = vld [vmem:[#allocation7 + $0xc] sm:$0xf]
    %v128 = vld [vmem:[#allocation7 + $0x10] sm:$0xf]
    %v129 = vld [vmem:[#allocation7 + $0x14] sm:$0xf]
    %v130 = vld [vmem:[#allocation7 + $0x18] sm:$0xf]
    %v131 = vld [vmem:[#allocation7 + $0x1c] sm:$0xf]
    %v132 = vld [vmem:[#allocation7 + $0x20] sm:$0xf]
    %v133 = vld [vmem:[#allocation7 + $0x24] sm:$0xf]
    %v134 = vld [vmem:[#allocation7 + $0x28] sm:$0xf]
    %v135 = vld [vmem:[#allocation7 + $0x2c] sm:$0xf]
    %v136 = vld [vmem:[#allocation7 + $0x30] sm:$0xf]
    %v137 = vld [vmem:[#allocation7 + $0x34] sm:$0xf]
    %v138 = vld [vmem:[#allocation7 + $0x38] sm:$0xf]
    %v139 = vld [vmem:[#allocation7 + $0x3c] sm:$0xf]
    %v140 = vld [vmem:[%s4] sm:$0x1]
    %v142 = vperm.slane %v140, 0
    %v160 = vunpack.c.l.b16 %v124
    %v161 = vunpack.c.l.b16 %v125
    %v162 = vunpack.c.l.b16 %v126
    %v163 = vunpack.c.l.b16 %v127
    %v164 = vunpack.c.l.b16 %v128
    %v165 = vunpack.c.l.b16 %v129
    %v166 = vunpack.c.l.b16 %v130
    %v167 = vunpack.c.l.b16 %v131
    %v168 = vunpack.c.l.b16 %v132
    %v169 = vunpack.c.l.b16 %v133
    %v170 = vunpack.c.l.b16 %v134
    %v171 = vunpack.c.l.b16 %v135
    %v172 = vunpack.c.l.b16 %v136
    %v173 = vunpack.c.l.b16 %v137
    %v174 = vunpack.c.l.b16 %v138
    %v175 = vunpack.c.l.b16 %v139
    %v176 = vpack.c.b16 %v161, %v160
    %v177 = vpack.c.b16 %v163, %v162
    %v178 = vpack.c.b16 %v165, %v164
    %v179 = vpack.c.b16 %v167, %v166
    %v180 = vpack.c.b16 %v169, %v168
    %v181 = vpack.c.b16 %v171, %v170
    %v182 = vpack.c.b16 %v173, %v172
    %v183 = vpack.c.b16 %v175, %v174
    %192 = vmatpush.bf16.msra.mxu0 %v183
    %193 = vmatpush.bf16.msra.mxu0 %v182
    %194 = vmatpush.bf16.msra.mxu0 %v181
    %195 = vmatpush.bf16.msra.mxu0 %v180
    %196 = vmatpush.bf16.msra.mxu0 %v179
    %197 = vmatpush.bf16.msra.mxu0 %v178
    %198 = vmatpush.bf16.msra.mxu0 %v177
    %199 = vmatpush.bf16.msra.mxu0 %v176
    %200 = vmatmul.bf16.gmra.mxu0 %v123
    %v201 = vpop.f32.mrf.mxu0
    %v202 = vadd.f32 %v142, %v201
    %v203 = vpop.f32.mrf.mxu0
    %204 = vdwg.mxu0
    %v205 = vmax.f32 %v202, 0.0
    %v206 = vpack.c.bf16 %v205, %v205
    %v207 = vld [vmem:[#allocation8] sm:$0xf]
    %v208 = vld [vmem:[#allocation8 + $0x4] sm:$0xf]
    %v209 = vld [vmem:[#allocation8 + $0x8] sm:$0xf]
    %v210 = vld [vmem:[#allocation8 + $0xc] sm:$0xf]
    %v211 = vld [vmem:[#allocation8 + $0x10] sm:$0xf]
    %v212 = vld [vmem:[#allocation8 + $0x14] sm:$0xf]
    %v213 = vld [vmem:[#allocation8 + $0x18] sm:$0xf]
    %v214 = vld [vmem:[#allocation8 + $0x1c] sm:$0xf]
    %v215 = vld [vmem:[#allocation8 + $0x20] sm:$0xf]
    %v216 = vld [vmem:[#allocation8 + $0x24] sm:$0xf]
    %v217 = vld [vmem:[#allocation8 + $0x28] sm:$0xf]
    %v218 = vld [vmem:[#allocation8 + $0x2c] sm:$0xf]
    %v219 = vld [vmem:[#allocation8 + $0x30] sm:$0xf]
    %v220 = vld [vmem:[#allocation8 + $0x34] sm:$0xf]
    %v221 = vld [vmem:[#allocation8 + $0x38] sm:$0xf]
    %v222 = vld [vmem:[#allocation8 + $0x3c] sm:$0xf]
    %v223 = vld [vmem:[%s6] sm:$0x1]
    %v225 = vperm.slane %v223, 0
    %v243 = vunpack.c.l.b16 %v207
    %v244 = vunpack.c.l.b16 %v208
    %v245 = vunpack.c.l.b16 %v209
    %v246 = vunpack.c.l.b16 %v210
    %v247 = vunpack.c.l.b16 %v211
    %v248 = vunpack.c.l.b16 %v212
    %v249 = vunpack.c.l.b16 %v213
    %v250 = vunpack.c.l.b16 %v214
    %v251 = vunpack.c.l.b16 %v215
    %v252 = vunpack.c.l.b16 %v216
    %v253 = vunpack.c.l.b16 %v217
    %v254 = vunpack.c.l.b16 %v218
    %v255 = vunpack.c.l.b16 %v219
    %v256 = vunpack.c.l.b16 %v220
    %v257 = vunpack.c.l.b16 %v221
    %v258 = vunpack.c.l.b16 %v222
    %v259 = vpack.c.b16 %v244, %v243
    %v260 = vpack.c.b16 %v246, %v245
    %v261 = vpack.c.b16 %v248, %v247
    %v262 = vpack.c.b16 %v250, %v249
    %v263 = vpack.c.b16 %v252, %v251
    %v264 = vpack.c.b16 %v254, %v253
    %v265 = vpack.c.b16 %v256, %v255
    %v266 = vpack.c.b16 %v258, %v257
    %275 = vmatpush.bf16.msra.mxu0 %v266
    %276 = vmatpush.bf16.msra.mxu0 %v265
    %277 = vmatpush.bf16.msra.mxu0 %v264
    %278 = vmatpush.bf16.msra.mxu0 %v263
    %279 = vmatpush.bf16.msra.mxu0 %v262
    %280 = vmatpush.bf16.msra.mxu0 %v261
    %281 = vmatpush.bf16.msra.mxu0 %v260
    %282 = vmatpush.bf16.msra.mxu0 %v259
    %283 = vmatmul.bf16.gmra.mxu0 %v206
    %v284 = vpop.f32.mrf.mxu0
    %v285 = vadd.f32 %v225, %v284
    %v286 = vpop.f32.mrf.mxu0
    %287 = vdwg.mxu0
    %v288 = vmax.f32 %v285, 0.0
    %v289 = vld [vmem:[%s7] sm:$0x1]
    %v291 = vperm.slane %v289, 0
    %v293 = vmul.f32 %v288, %v291
    %vm294 = vcmask 1043456
    %v295 = vsel %vm294, %v293, 0.0
    %296 = vadd.xlane.f32.xlu0 %v295
    %v297 = vpop.xlane.xlu0 %296
    %s298 = sld [smem:[#allocation2]]
    %v299 = vstv %s298
    %v300 = vadd.f32 %v297, %v299
    %vm301 = vcmask 3072
    %302 = vst.msk [vmem:[%s9] sm:$0xf] %vm301, %v300
    // Predicated region
    $region54: #{tpu_custom_call.1} parent=1 // pred_check
      _
    $region55: #{tpu_custom_call.1} parent=1 // pred_check_branch
      %304 = sbr.rel (0) target = $region57
    $region56: #{tpu_custom_call.1} parent=1 // pred_region
      _
    $region57: #{tpu_custom_call.1} parent=1 // pred_fallthru
      _
    // Predicated region
    $region58: #{tpu_custom_call.1} parent=1 // pred_check
      _
    $region59: #{tpu_custom_call.1} parent=1 // pred_check_branch
      %306 = sbr.rel (0) target = $region61
    $region60: #{tpu_custom_call.1} parent=1 // pred_region
      _
    $region61: #{tpu_custom_call.1} parent=1 // pred_fallthru
      _
    %307 = vsyncpa [#allocation4], 1
    %308 = vsyncpa [#allocation6], 1
    %309 = vsyncpa [#allocation9], 1

</llo_original>
